<compile_context>
chip_gen: v7x
topology: tpu7x:2x2x1
jax: 0.10.0
libtpu: 0.0.40
codegen_flags: <defaults>
</compile_context>

<pallas_src>
import jax
import jax.numpy as jnp
from jax import lax
from jax.experimental import pallas as pl
from jax.experimental.pallas import tpu as pltpu

LN_EPS = 1e-5  # nn.LayerNorm default


def _posembed_ln_kernel(x_ref, cls_ref, pos0_ref, pos_rest_ref,
                        gamma_ref, beta_ref, o_ref):
    # x_ref: (TB, N, F)        cls_ref/pos0_ref: (1, 1, F)
    # pos_rest_ref: (1, N, F)  gamma_ref/beta_ref: (1, 1, F)
    # o_ref: (TB, S, F) with S = N + 1
    TB, N, F = x_ref.shape
    inv_f = jnp.float32(1.0 / F)

    g = gamma_ref[...].astype(jnp.float32)   # (1, 1, F)
    b = beta_ref[...].astype(jnp.float32)    # (1, 1, F)

    # ---- cls row: batch-invariant, LayerNorm'd once per grid step ----
    cls_h = cls_ref[...].astype(jnp.float32) + pos0_ref[...].astype(jnp.float32)
    c_mean = jnp.sum(cls_h, axis=-1, keepdims=True) * inv_f
    c_var = jnp.sum(cls_h * cls_h, axis=-1, keepdims=True) * inv_f - c_mean * c_mean
    c_var = jnp.maximum(c_var, 0.0)
    cls_y = (cls_h - c_mean) * lax.rsqrt(c_var + LN_EPS) * g + b      # (1, 1, F)
    o_ref[:, pl.ds(0, 1), :] = jnp.broadcast_to(cls_y, (TB, 1, F)).astype(o_ref.dtype)

    # ---- body rows: x + pos[1:], single-pass LayerNorm stats in f32 ----
    h = x_ref[...].astype(jnp.float32) + pos_rest_ref[...].astype(jnp.float32)
    s1 = jnp.sum(h, axis=-1, keepdims=True)
    s2 = jnp.sum(h * h, axis=-1, keepdims=True)
    mean = s1 * inv_f
    var = jnp.maximum(s2 * inv_f - mean * mean, 0.0)
    inv = lax.rsqrt(var + LN_EPS)
    y = (h - mean) * inv * g + b
    o_ref[:, pl.ds(1, N), :] = y.astype(o_ref.dtype)

    # TODO(synk): Dropout (pos_drop) omitted -- eval/inference semantics (identity).


def _tpu_budgets():
    """Per-generation VMEM budgets: (step_budget, vmem_limit, num_tc)."""
    vmem_phys = 128 * 1024 * 1024
    try:
        info = pltpu.get_tpu_info()
        vmem_phys = int(getattr(info, "vmem_capacity_bytes", vmem_phys))
    except Exception:
        pass
    if vmem_phys <= 64 * 1024 * 1024:
        # v7x-class: 64 MiB VMEM per TC, 2 TensorCores per chip.
        return 32 * 1024 * 1024, 48 * 1024 * 1024, 2
    # v5e / v6e: 128 MiB VMEM, 1 TensorCore per chip.
    return 40 * 1024 * 1024, 64 * 1024 * 1024, 1


def _choose_block_b(B, N, F, itemsize, step_budget_bytes, num_tc):
    """How many batch elements per grid step, sized by the real footprint."""
    S = N + 1
    # Real per-batch-row VMEM footprint of one grid step:
    #   2x double-buffered x input + 2x double-buffered output
    #   + ~3x f32 intermediates (h, normalized y, stats/broadcast temps).
    per_b = 2 * N * F * itemsize + 2 * S * F * itemsize + 3 * S * F * 4
    tb = max(1, min(B, step_budget_bytes // max(per_b, 1)))
    # Only split a fitting workload on multi-TensorCore chips (v7x).
    if num_tc >= 2 and tb >= B and B > 1:
        tb = (B + 1) // 2
    # Round down to a divisor of B to avoid partial output tiles.
    while B % tb:
        tb -= 1
    return tb


def position_embedding_static(x, cls_token, pos_embed, ln_gamma, ln_beta,
                              *, block_b=None):
    """x: (B, N, F); cls_token: (1, 1, F); pos_embed: (1, N+1, F);
    ln_gamma, ln_beta: (F,).  Returns (B, N+1, F) in x.dtype."""
    B, N, F = x.shape
    S = N + 1
    assert pos_embed.shape == (1, S, F)
    assert cls_token.shape == (1, 1, F)

    # Static, trace-time splits/reshapes (done once; no per-step work).
    pos0 = pos_embed[:, 0:1, :]
    pos_rest = pos_embed[:, 1:, :]
    gamma = ln_gamma.reshape(1, 1, F)
    beta = ln_beta.reshape(1, 1, F)

    step_budget, vmem_limit, num_tc = _tpu_budgets()
    if block_b is None:
        block_b = _choose_block_b(B, N, F, x.dtype.itemsize, step_budget, num_tc)
    grid = (B // block_b,)

    out = pl.pallas_call(
        _posembed_ln_kernel,
        out_shape=jax.ShapeDtypeStruct((B, S, F), x.dtype),
        grid_spec=pltpu.PrefetchScalarGridSpec(
            num_scalar_prefetch=0,
            grid=grid,
            in_specs=[
                pl.BlockSpec((block_b, N, F), lambda i: (i, 0, 0)),  # x tile
                pl.BlockSpec((1, 1, F), lambda i: (0, 0, 0)),        # cls (resident)
                pl.BlockSpec((1, 1, F), lambda i: (0, 0, 0)),        # pos[0] (resident)
                pl.BlockSpec((1, N, F), lambda i: (0, 0, 0)),        # pos[1:] (resident)
                pl.BlockSpec((1, 1, F), lambda i: (0, 0, 0)),        # gamma
                pl.BlockSpec((1, 1, F), lambda i: (0, 0, 0)),        # beta
            ],
            out_specs=pl.BlockSpec((block_b, S, F), lambda i: (i, 0, 0)),
        ),
        compiler_params=pltpu.CompilerParams(
            dimension_semantics=("parallel",),
            vmem_limit_bytes=vmem_limit,
        ),
    )(x, cls_token, pos0, pos_rest, gamma, beta)
    return out


def _reference(x, cls_token, pos_embed, ln_gamma, ln_beta):
    B, N, F = x.shape
    cls = jnp.broadcast_to(cls_token, (B, 1, F)).astype(x.dtype)
    xc = jnp.concatenate([cls, x], axis=1)
    h = xc.astype(jnp.float32) + pos_embed.astype(jnp.float32)
    mean = jnp.mean(h, axis=-1, keepdims=True)
    var = jnp.mean((h - mean) ** 2, axis=-1, keepdims=True)
    y = (h - mean) * lax.rsqrt(var + LN_EPS) * ln_gamma + ln_beta
    return y.astype(x.dtype)


if __name__ == "__main__":
    # Small shapes consistent with the module: B=2, num_patches=8, num_features=32.
    B, N, F = 2, 8, 32
    S = N + 1

    key = jax.random.PRNGKey(0)
    kx, kc, kp, kg, kb = jax.random.split(key, 5)

    x = jax.random.normal(kx, (B, N, F), dtype=jnp.float32)
    # Module inits these params to zeros; use small deterministic random values
    # instead so the kernel compute is exercised nontrivially.
    cls_token = 0.02 * jax.random.normal(kc, (1, 1, F), dtype=jnp.float32)
    pos_embed = 0.02 * jax.random.normal(kp, (1, S, F), dtype=jnp.float32)
    ln_gamma = jnp.ones((F,), dtype=jnp.float32) + 0.01 * jax.random.normal(kg, (F,))
    ln_beta = 0.01 * jax.random.normal(kb, (F,), dtype=jnp.float32)

    out = position_embedding_static(x, cls_token, pos_embed, ln_gamma, ln_beta)
    out = jax.block_until_ready(out)

    ref = _reference(x, cls_token, pos_embed, ln_gamma, ln_beta)
    assert out.shape == (B, S, F), out.shape
    assert jnp.allclose(out, ref, atol=1e-4, rtol=1e-4), float(
        jnp.max(jnp.abs(out - ref)))

    print("KERNEL_OK")
</pallas_src>

<mosaic_0001>
module attributes {stable_mosaic.version = 11 : i64} {
  func.func @_posembed_ln_kernel(%arg0: i32, %arg1: memref<2x8x32xf32, #tpu.memory_space<vmem>>, %arg2: memref<1x1x32xf32, #tpu.memory_space<vmem>>, %arg3: memref<1x1x32xf32, #tpu.memory_space<vmem>>, %arg4: memref<1x8x32xf32, #tpu.memory_space<vmem>>, %arg5: memref<1x1x32xf32, #tpu.memory_space<vmem>>, %arg6: memref<1x1x32xf32, #tpu.memory_space<vmem>>, %arg7: memref<2x9x32xf32, #tpu.memory_space<vmem>>) attributes {dimension_semantics = [#tpu.dimension_semantics<parallel>], iteration_bounds = array<i64: 1>, scalar_prefetch = 0 : i64, scratch_operands = 0 : i64, tpu.core_type = #tpu.core_type<tc>, window_params = [{transform_indices = @transform_0, window_bounds = array<i64: 2, 8, 32>}, {pipeline_mode = #tpu.pipeline_mode<synchronous>, transform_indices = @transform_1, window_bounds = array<i64: 1, 1, 32>}, {pipeline_mode = #tpu.pipeline_mode<synchronous>, transform_indices = @transform_2, window_bounds = array<i64: 1, 1, 32>}, {pipeline_mode = #tpu.pipeline_mode<synchronous>, transform_indices = @transform_3, window_bounds = array<i64: 1, 8, 32>}, {pipeline_mode = #tpu.pipeline_mode<synchronous>, transform_indices = @transform_4, window_bounds = array<i64: 1, 1, 32>}, {pipeline_mode = #tpu.pipeline_mode<synchronous>, transform_indices = @transform_5, window_bounds = array<i64: 1, 1, 32>}, {transform_indices = @transform_6, window_bounds = array<i64: 2, 9, 32>}]} {
    %c0 = arith.constant 0 : index
    %c0_0 = arith.constant 0 : index
    %c0_1 = arith.constant 0 : index
    %0 = vector.load %arg5[%c0, %c0_0, %c0_1] : memref<1x1x32xf32, #tpu.memory_space<vmem>>, vector<1x1x32xf32>
    %c0_2 = arith.constant 0 : index
    %c0_3 = arith.constant 0 : index
    %c0_4 = arith.constant 0 : index
    %1 = vector.load %arg6[%c0_2, %c0_3, %c0_4] : memref<1x1x32xf32, #tpu.memory_space<vmem>>, vector<1x1x32xf32>
    %c0_5 = arith.constant 0 : index
    %c0_6 = arith.constant 0 : index
    %c0_7 = arith.constant 0 : index
    %2 = vector.load %arg2[%c0_5, %c0_6, %c0_7] : memref<1x1x32xf32, #tpu.memory_space<vmem>>, vector<1x1x32xf32>
    %c0_8 = arith.constant 0 : index
    %c0_9 = arith.constant 0 : index
    %c0_10 = arith.constant 0 : index
    %3 = vector.load %arg3[%c0_8, %c0_9, %c0_10] : memref<1x1x32xf32, #tpu.memory_space<vmem>>, vector<1x1x32xf32>
    %4 = arith.addf %2, %3 : vector<1x1x32xf32>
    %cst = arith.constant dense<0.000000e+00> : vector<1x1xf32>
    %5 = vector.multi_reduction <add>, %4, %cst [2] : vector<1x1x32xf32> to vector<1x1xf32>
    %6 = vector.shape_cast %5 : vector<1x1xf32> to vector<1x1x1xf32>
    %cst_11 = arith.constant 3.125000e-02 : f32
    %7 = vector.broadcast %cst_11 : f32 to vector<1x1x1xf32>
    %8 = arith.mulf %6, %7 : vector<1x1x1xf32>
    %9 = arith.mulf %4, %4 : vector<1x1x32xf32>
    %cst_12 = arith.constant dense<0.000000e+00> : vector<1x1xf32>
    %10 = vector.multi_reduction <add>, %9, %cst_12 [2] : vector<1x1x32xf32> to vector<1x1xf32>
    %11 = vector.shape_cast %10 : vector<1x1xf32> to vector<1x1x1xf32>
    %cst_13 = arith.constant 3.125000e-02 : f32
    %12 = vector.broadcast %cst_13 : f32 to vector<1x1x1xf32>
    %13 = arith.mulf %11, %12 : vector<1x1x1xf32>
    %14 = arith.mulf %8, %8 : vector<1x1x1xf32>
    %15 = arith.subf %13, %14 : vector<1x1x1xf32>
    %cst_14 = arith.constant 0.000000e+00 : f32
    %16 = vector.broadcast %cst_14 : f32 to vector<1x1x1xf32>
    %17 = arith.maximumf %15, %16 : vector<1x1x1xf32>
    %18 = vector.broadcast %8 : vector<1x1x1xf32> to vector<1x1x32xf32>
    %19 = arith.subf %4, %18 : vector<1x1x32xf32>
    %cst_15 = arith.constant 9.99999974E-6 : f32
    %20 = vector.broadcast %cst_15 : f32 to vector<1x1x1xf32>
    %21 = arith.addf %17, %20 : vector<1x1x1xf32>
    %22 = math.rsqrt %21 : vector<1x1x1xf32>
    %23 = vector.broadcast %22 : vector<1x1x1xf32> to vector<1x1x32xf32>
    %24 = arith.mulf %19, %23 : vector<1x1x32xf32>
    %25 = arith.mulf %24, %0 : vector<1x1x32xf32>
    %26 = arith.addf %25, %1 : vector<1x1x32xf32>
    %27 = vector.shape_cast %26 : vector<1x1x32xf32> to vector<1x1x32xf32>
    %28 = vector.broadcast %27 : vector<1x1x32xf32> to vector<2x1x32xf32>
    %c0_16 = arith.constant 0 : index
    %c0_17 = arith.constant 0 : index
    %c0_18 = arith.constant 0 : index
    %29 = vector.load %arg7[%c0_16, %c0_17, %c0_18] : memref<2x9x32xf32, #tpu.memory_space<vmem>>, vector<2x1x32xf32>
    tpu.vector_store %arg7[%c0_16, %c0_17, %c0_18], %28 {strides = array<i32>} : memref<2x9x32xf32, #tpu.memory_space<vmem>>, vector<2x1x32xf32>,
    %c0_19 = arith.constant 0 : index
    %c0_20 = arith.constant 0 : index
    %c0_21 = arith.constant 0 : index
    %30 = vector.load %arg1[%c0_19, %c0_20, %c0_21] : memref<2x8x32xf32, #tpu.memory_space<vmem>>, vector<2x8x32xf32>
    %c0_22 = arith.constant 0 : index
    %c0_23 = arith.constant 0 : index
    %c0_24 = arith.constant 0 : index
    %31 = vector.load %arg4[%c0_22, %c0_23, %c0_24] : memref<1x8x32xf32, #tpu.memory_space<vmem>>, vector<1x8x32xf32>
    %32 = vector.broadcast %31 : vector<1x8x32xf32> to vector<2x8x32xf32>
    %33 = arith.addf %30, %32 : vector<2x8x32xf32>
    %cst_25 = arith.constant dense<0.000000e+00> : vector<2x8xf32>
    %34 = vector.multi_reduction <add>, %33, %cst_25 [2] : vector<2x8x32xf32> to vector<2x8xf32>
    %35 = vector.shape_cast %34 : vector<2x8xf32> to vector<2x8x1xf32>
    %36 = arith.mulf %33, %33 : vector<2x8x32xf32>
    %cst_26 = arith.constant dense<0.000000e+00> : vector<2x8xf32>
    %37 = vector.multi_reduction <add>, %36, %cst_26 [2] : vector<2x8x32xf32> to vector<2x8xf32>
    %38 = vector.shape_cast %37 : vector<2x8xf32> to vector<2x8x1xf32>
    %cst_27 = arith.constant 3.125000e-02 : f32
    %39 = vector.broadcast %cst_27 : f32 to vector<2x8x1xf32>
    %40 = arith.mulf %35, %39 : vector<2x8x1xf32>
    %cst_28 = arith.constant 3.125000e-02 : f32
    %41 = vector.broadcast %cst_28 : f32 to vector<2x8x1xf32>
    %42 = arith.mulf %38, %41 : vector<2x8x1xf32>
    %43 = arith.mulf %40, %40 : vector<2x8x1xf32>
    %44 = arith.subf %42, %43 : vector<2x8x1xf32>
    %cst_29 = arith.constant 0.000000e+00 : f32
    %45 = vector.broadcast %cst_29 : f32 to vector<2x8x1xf32>
    %46 = arith.maximumf %44, %45 : vector<2x8x1xf32>
    %cst_30 = arith.constant 9.99999974E-6 : f32
    %47 = vector.broadcast %cst_30 : f32 to vector<2x8x1xf32>
    %48 = arith.addf %46, %47 : vector<2x8x1xf32>
    %49 = math.rsqrt %48 : vector<2x8x1xf32>
    %50 = vector.broadcast %40 : vector<2x8x1xf32> to vector<2x8x32xf32>
    %51 = arith.subf %33, %50 : vector<2x8x32xf32>
    %52 = vector.broadcast %49 : vector<2x8x1xf32> to vector<2x8x32xf32>
    %53 = arith.mulf %51, %52 : vector<2x8x32xf32>
    %54 = vector.broadcast %0 : vector<1x1x32xf32> to vector<2x8x32xf32>
    %55 = arith.mulf %53, %54 : vector<2x8x32xf32>
    %56 = vector.broadcast %1 : vector<1x1x32xf32> to vector<2x8x32xf32>
    %57 = arith.addf %55, %56 : vector<2x8x32xf32>
    %c0_31 = arith.constant 0 : index
    %c1 = arith.constant 1 : index
    %c0_32 = arith.constant 0 : index
    %58 = vector.load %arg7[%c0_31, %c1, %c0_32] : memref<2x9x32xf32, #tpu.memory_space<vmem>>, vector<2x8x32xf32>
    tpu.vector_store %arg7[%c0_31, %c1, %c0_32], %57 {strides = array<i32>} : memref<2x9x32xf32, #tpu.memory_space<vmem>>, vector<2x8x32xf32>,
    return
  }
  func.func @transform_0(%arg0: i32) -> (i32, i32, i32) {
    %c0_i32 = arith.constant 0 : i32
    %c0_i32_0 = arith.constant 0 : i32
    %c0_i32_1 = arith.constant 0 : i32
    return %arg0, %c0_i32, %c0_i32_0 : i32, i32, i32
  }
  func.func @transform_1(%arg0: i32) -> (i32, i32, i32) {
    %c0_i32 = arith.constant 0 : i32
    %c0_i32_0 = arith.constant 0 : i32
    %c0_i32_1 = arith.constant 0 : i32
    %c0_i32_2 = arith.constant 0 : i32
    return %c0_i32, %c0_i32_0, %c0_i32_1 : i32, i32, i32
  }
  func.func @transform_2(%arg0: i32) -> (i32, i32, i32) {
    %c0_i32 = arith.constant 0 : i32
    %c0_i32_0 = arith.constant 0 : i32
    %c0_i32_1 = arith.constant 0 : i32
    %c0_i32_2 = arith.constant 0 : i32
    return %c0_i32, %c0_i32_0, %c0_i32_1 : i32, i32, i32
  }
  func.func @transform_3(%arg0: i32) -> (i32, i32, i32) {
    %c0_i32 = arith.constant 0 : i32
    %c0_i32_0 = arith.constant 0 : i32
    %c0_i32_1 = arith.constant 0 : i32
    %c0_i32_2 = arith.constant 0 : i32
    return %c0_i32, %c0_i32_0, %c0_i32_1 : i32, i32, i32
  }
  func.func @transform_4(%arg0: i32) -> (i32, i32, i32) {
    %c0_i32 = arith.constant 0 : i32
    %c0_i32_0 = arith.constant 0 : i32
    %c0_i32_1 = arith.constant 0 : i32
    %c0_i32_2 = arith.constant 0 : i32
    return %c0_i32, %c0_i32_0, %c0_i32_1 : i32, i32, i32
  }
  func.func @transform_5(%arg0: i32) -> (i32, i32, i32) {
    %c0_i32 = arith.constant 0 : i32
    %c0_i32_0 = arith.constant 0 : i32
    %c0_i32_1 = arith.constant 0 : i32
    %c0_i32_2 = arith.constant 0 : i32
    return %c0_i32, %c0_i32_0, %c0_i32_1 : i32, i32, i32
  }
  func.func @transform_6(%arg0: i32) -> (i32, i32, i32) {
    %c0_i32 = arith.constant 0 : i32
    %c0_i32_0 = arith.constant 0 : i32
    %c0_i32_1 = arith.constant 0 : i32
    return %arg0, %c0_i32, %c0_i32_0 : i32, i32, i32
  }
}

</mosaic_0001>

<llo_original>
// kernel: tpu_custom_call.1
$region0: #{tpu_custom_call.1}
  #allocation0 [shape = 'u32[]', space=smem, size = 0x4, offset = 0x4, fixed_abs, tag = 'smem constant byte address 0x4 - core index']
  #allocation1 [shape = 'u32[144,128]{1,0:T(1,128)}', space=vmem, size = 0x12000, scoped, tag = 'internal scratch']
  %s0 = inlined_call_operand.hbm [shape: f32[2,8,32], index: 0, kind: input, shape index: {}]
  %s1 = inlined_call_operand.hbm [shape: f32[1,1,32], index: 1, kind: input, shape index: {}]
  %s2 = inlined_call_operand.hbm [shape: f32[1,1,32], index: 2, kind: input, shape index: {}]
  %s3 = inlined_call_operand.hbm [shape: f32[1,8,32], index: 3, kind: input, shape index: {}]
  %s4 = inlined_call_operand.hbm [shape: f32[1,1,32], index: 4, kind: input, shape index: {}]
  %s5 = inlined_call_operand.hbm [shape: f32[1,1,32], index: 5, kind: input, shape index: {}]
  %s6 = inlined_call_operand.hbm [shape: f32[2,9,32], index: 6, kind: output, shape index: {}]
  %s7 = sld [smem:[#allocation0]]
  $region58: #{tpu_custom_call.1} parent=0
    _
  %s9 = ssub.s32 1, %s7
  %s10 = scalar_select 0, %s9, %s7
  $region1: #{tpu_custom_call.1} parent=0
    #allocation2 [shape = 'u8[8192]{0}', space=vmem, size = 0x2000, scoped, tag = 'input window, operand 0, single buffered']
    #allocation3 [shape = 's32[1]{0}', space=sflag, size = 0x4, scoped, tag = 'scoped memory for tpu_custom_call.1']
    #allocation4 [shape = 's32[1]{0}', space=sflag, size = 0x4, scoped, tag = 'scoped memory for tpu_custom_call.1']
    #allocation5 [shape = 'u8[512]{0}', space=vmem, size = 0x400, scoped, tag = 'input window, operand 1, single buffered']
    #allocation6 [shape = 's32[1]{0}', space=sflag, size = 0x4, scoped, tag = 'scoped memory for tpu_custom_call.1']
    #allocation7 [shape = 'u8[512]{0}', space=vmem, size = 0x400, scoped, tag = 'input window, operand 2, single buffered']
    #allocation8 [shape = 'u8[4096]{0}', space=vmem, size = 0x1000, scoped, tag = 'input window, operand 3, single buffered']
    #allocation9 [shape = 's32[1]{0}', space=sflag, size = 0x4, scoped, tag = 'scoped memory for tpu_custom_call.1']
    #allocation10 [shape = 'u8[512]{0}', space=vmem, size = 0x400, scoped, tag = 'input window, operand 4, single buffered']
    #allocation11 [shape = 'u8[512]{0}', space=vmem, size = 0x400, scoped, tag = 'input window, operand 5, single buffered']
    #allocation12 [shape = 's32[1]{0}', space=sflag, size = 0x4, scoped, tag = 'scoped memory for tpu_custom_call.1']
    #allocation13 [shape = 'u8[16384]{0}', space=vmem, size = 0x4000, scoped, tag = 'output window, operand 0, single buffered']
    %11 = vsyncpa [#allocation3], 0
    %12 = vsyncpa [#allocation6], 0
    %13 = vsyncpa [#allocation9], 0
    %14 = vsyncpa [#allocation12], 0
    %15 = vsyncpa [#allocation4], 0
    // Predicated region
    $region2: #{tpu_custom_call.1} parent=1 // pred_check
      _
    $region3: #{tpu_custom_call.1} parent=1 // pred_check_branch
      %17 = sbr.rel (0) target = $region5
    $region4: #{tpu_custom_call.1} parent=1 // pred_region
      %s19 = ssub.s32 256, 256
      %20 = vsyncadd [#allocation3], %s19
      %s21 = sshll.u32 [#allocation2], 4
      %s22 = int_to_ptr.vmem [resolvable:$true] %s21
      %27 = dma.hbm_to_vmem [thread:$0]  %s0, 256, %s22, [#allocation3], 128, 128, 8
    $region5: #{tpu_custom_call.1} parent=1 // pred_fallthru
      _
    // Predicated region
    $region6: #{tpu_custom_call.1} parent=1 // pred_check
      _
    $region7: #{tpu_custom_call.1} parent=1 // pred_check_branch
      %29 = sbr.rel (0) target = $region9
    $region8: #{tpu_custom_call.1} parent=1 // pred_region
      %s31 = ssub.s32 16, 16
      %32 = vsyncadd [#allocation6], %s31
      %s34 = sshll.u32 [#allocation5], 4
      %s35 = int_to_ptr.vmem [resolvable:$true] %s34
      %37 = dma.hbm_to_vmem [thread:$0]  %s1, 16, %s35, [#allocation6]
    $region9: #{tpu_custom_call.1} parent=1 // pred_fallthru
      _
    // Predicated region
    $region10: #{tpu_custom_call.1} parent=1 // pred_check
      _
    $region11: #{tpu_custom_call.1} parent=1 // pred_check_branch
      %39 = sbr.rel (0) target = $region13
    $region12: #{tpu_custom_call.1} parent=1 // pred_region
      %s41 = ssub.s32 16, 16
      %42 = vsyncadd [#allocation6], %s41
      %s44 = sshll.u32 [#allocation7], 4
      %s45 = int_to_ptr.vmem [resolvable:$true] %s44
      %47 = dma.hbm_to_vmem [thread:$0]  %s2, 16, %s45, [#allocation6]
    $region13: #{tpu_custom_call.1} parent=1 // pred_fallthru
      _
    // Predicated region
    $region14: #{tpu_custom_call.1} parent=1 // pred_check
      _
    $region15: #{tpu_custom_call.1} parent=1 // pred_check_branch
      %49 = sbr.rel (0) target = $region17
    $region16: #{tpu_custom_call.1} parent=1 // pred_region
      %s51 = ssub.s32 128, 128
      %52 = vsyncadd [#allocation9], %s51
      %s54 = sshll.u32 [#allocation8], 4
      %s55 = int_to_ptr.vmem [resolvable:$true] %s54
      %57 = dma.hbm_to_vmem [thread:$0]  %s3, 128, %s55, [#allocation9]
    $region17: #{tpu_custom_call.1} parent=1 // pred_fallthru
      _
    // Predicated region
    $region18: #{tpu_custom_call.1} parent=1 // pred_check
      _
    $region19: #{tpu_custom_call.1} parent=1 // pred_check_branch
      %59 = sbr.rel (0) target = $region21
    $region20: #{tpu_custom_call.1} parent=1 // pred_region
      %s61 = ssub.s32 16, 16
      %62 = vsyncadd [#allocation9], %s61
      %s64 = sshll.u32 [#allocation10], 4
      %s65 = int_to_ptr.vmem [resolvable:$true] %s64
      %67 = dma.hbm_to_vmem [thread:$0]  %s4, 16, %s65, [#allocation9]
    $region21: #{tpu_custom_call.1} parent=1 // pred_fallthru
      _
    // Predicated region
    $region22: #{tpu_custom_call.1} parent=1 // pred_check
      _
    $region23: #{tpu_custom_call.1} parent=1 // pred_check_branch
      %69 = sbr.rel (0) target = $region25
    $region24: #{tpu_custom_call.1} parent=1 // pred_region
      %s71 = ssub.s32 16, 16
      %72 = vsyncadd [#allocation12], %s71
      %s74 = sshll.u32 [#allocation11], 4
      %s75 = int_to_ptr.vmem [resolvable:$true] %s74
      %77 = dma.hbm_to_vmem [thread:$0]  %s5, 16, %s75, [#allocation12]
    $region25: #{tpu_custom_call.1} parent=1 // pred_fallthru
      _
    // Predicated region
    $region26: #{tpu_custom_call.1} parent=1 // pred_check
      _
    $region27: #{tpu_custom_call.1} parent=1 // pred_check_branch
      %79 = sbr.rel (0) target = $region29
    $region28: #{tpu_custom_call.1} parent=1 // pred_region
      %80 = dma.done [#allocation3], 256
    $region29: #{tpu_custom_call.1} parent=1 // pred_fallthru
      _
    // Predicated region
    $region30: #{tpu_custom_call.1} parent=1 // pred_check
      _
    $region31: #{tpu_custom_call.1} parent=1 // pred_check_branch
      %82 = sbr.rel (0) target = $region33
    $region32: #{tpu_custom_call.1} parent=1 // pred_region
      %83 = dma.done [#allocation6], 16
    $region33: #{tpu_custom_call.1} parent=1 // pred_fallthru
      _
    // Predicated region
    $region34: #{tpu_custom_call.1} parent=1 // pred_check
      _
    $region35: #{tpu_custom_call.1} parent=1 // pred_check_branch
      %85 = sbr.rel (0) target = $region37
    $region36: #{tpu_custom_call.1} parent=1 // pred_region
      %86 = dma.done [#allocation6], 16
    $region37: #{tpu_custom_call.1} parent=1 // pred_fallthru
      _
    // Predicated region
    $region38: #{tpu_custom_call.1} parent=1 // pred_check
      _
    $region39: #{tpu_custom_call.1} parent=1 // pred_check_branch
      %88 = sbr.rel (0) target = $region41
    $region40: #{tpu_custom_call.1} parent=1 // pred_region
      %89 = dma.done [#allocation9], 128
    $region41: #{tpu_custom_call.1} parent=1 // pred_fallthru
      _
    // Predicated region
    $region42: #{tpu_custom_call.1} parent=1 // pred_check
      _
    $region43: #{tpu_custom_call.1} parent=1 // pred_check_branch
      %91 = sbr.rel (0) target = $region45
    $region44: #{tpu_custom_call.1} parent=1 // pred_region
      %92 = dma.done [#allocation9], 16
    $region45: #{tpu_custom_call.1} parent=1 // pred_fallthru
      _
    // Predicated region
    $region46: #{tpu_custom_call.1} parent=1 // pred_check
      _
    $region47: #{tpu_custom_call.1} parent=1 // pred_check_branch
      %94 = sbr.rel (0) target = $region49
    $region48: #{tpu_custom_call.1} parent=1 // pred_region
      %95 = dma.done [#allocation12], 16
    $region49: #{tpu_custom_call.1} parent=1 // pred_fallthru
      _
    %v96 = vld [vmem:[#allocation10] sm:$0x1]
    %v97 = vld [vmem:[#allocation11] sm:$0x1]
    %v98 = vld [vmem:[#allocation5] sm:$0x1]
    %v99 = vld [vmem:[#allocation7] sm:$0x1]
    %v100 = vadd.f32 %v98, %v99
    %vm101 = vcmask 253952
    %v102 = vsel %vm101, %v100, 0.0
    %103 = vadd.xlane.f32.xlu0 %v102
    %v104 = vpop.xlane.xlu0 %103
    %v105 = vmul.f32 %v104, 0.03125
    %v106 = vmul.f32 %v100, %v100
    %v107 = vsel %vm101, %v106, 0.0
    %108 = vadd.xlane.f32.xlu0 %v107
    %v109 = vpop.xlane.xlu0 %108
    %v110 = vmul.f32 %v109, 0.03125
    %v111 = vmul.f32 %v105, %v105
    %v112 = vsub.f32 %v110, %v111
    %v113 = vmax.f32 %v112, 0.0
    %v114 = vsub.f32 %v100, %v105
    %v115 = vadd.f32 %v113, 1e-05
    %v116 = vrsqrt.pop %v115
    %v117 = vmul.f32 %v114, %v116
    %v118 = vmul.f32 %v117, %v96
    %v119 = vadd.f32 %v118, %v97
    %120 = vst.msk [vmem:[#allocation13] sm:$0x1] %vm101, %v119
    %121 = vst.msk [vmem:[#allocation13 + $0x10] sm:$0x1] %vm101, %v119
    %v122 = vld [vmem:[#allocation2] sm:$0xff]
    %v123 = vld [vmem:[#allocation2 + $0x8] sm:$0xff]
    %v124 = vld [vmem:[#allocation8] sm:$0xff]
    %v125 = vadd.f32 %v122, %v124
    %v126 = vadd.f32 %v123, %v124
    %vm127 = vcmask 261120
    %v128 = vsel %vm127, %v125, 0.0
    %129 = vadd.xlane.f32.xlu0 %v128
    %v130 = vpop.xlane.xlu0 %129
    %v131 = vsel %vm127, %v126, 0.0
    %132 = vadd.xlane.f32.xlu0 %v131
    %v133 = vpop.xlane.xlu0 %132
    %v134 = vmul.f32 %v125, %v125
    %v135 = vmul.f32 %v126, %v126
    %v136 = vsel %vm127, %v134, 0.0
    %137 = vadd.xlane.f32.xlu0 %v136
    %v138 = vpop.xlane.xlu0 %137
    %v139 = vsel %vm127, %v135, 0.0
    %140 = vadd.xlane.f32.xlu0 %v139
    %v141 = vpop.xlane.xlu0 %140
    %v142 = vmul.f32 %v130, 0.03125
    %v143 = vmul.f32 %v133, 0.03125
    %v144 = vmul.f32 %v138, 0.03125
    %v145 = vmul.f32 %v141, 0.03125
    %v146 = vmul.f32 %v142, %v142
    %v147 = vmul.f32 %v143, %v143
    %v148 = vsub.f32 %v144, %v146
    %v149 = vsub.f32 %v145, %v147
    %v150 = vmax.f32 %v148, 0.0
    %v151 = vmax.f32 %v149, 0.0
    %v152 = vadd.f32 %v150, 1e-05
    %v153 = vadd.f32 %v151, 1e-05
    %v154 = vrsqrt.pop %v152
    %v155 = vrsqrt.pop %v153
    %v156 = vsub.f32 %v125, %v142
    %v157 = vsub.f32 %v126, %v143
    %v158 = vmul.f32 %v156, %v154
    %v159 = vmul.f32 %v157, %v155
    %v161 = vlaneseq
    %v162 = vshrl.u32 %v161, 7
    %v163 = vsub.s32 0, %v162
    %v164 = vrot.slane %v96, %v163
    %v166 = vmul.f32 %v158, %v164
    %v167 = vmul.f32 %v159, %v164
    %v169 = vlaneseq
    %v170 = vshrl.u32 %v169, 7
    %v171 = vsub.s32 0, %v170
    %v172 = vrot.slane %v97, %v171
    %v174 = vadd.f32 %v166, %v172
    %v175 = vadd.f32 %v167, %v172
    %176 = vst.msk [vmem:[#allocation13 + $0x1] sm:$0xff] %vm127, %v174
    %177 = vst.msk [vmem:[#allocation13 + $0x11] sm:$0xff] %vm127, %v175
    // Predicated region
    $region50: #{tpu_custom_call.1} parent=1 // pred_check
      _
    $region51: #{tpu_custom_call.1} parent=1 // pred_check_branch
      %179 = sbr.rel (0) target = $region53
    $region52: #{tpu_custom_call.1} parent=1 // pred_region
      %s181 = ssub.s32 512, 512
      %182 = vsyncadd [#allocation4], %s181
      %s183 = sshll.u32 [#allocation13], 4
      %s184 = int_to_ptr.vmem [resolvable:$true] %s183
      %189 = dma.vmem_to_hbm [thread:$0]  %s184, 512, %s6, [#allocation4], 128, 128, 8
    $region53: #{tpu_custom_call.1} parent=1 // pred_fallthru
      _
    // Predicated region
    $region54: #{tpu_custom_call.1} parent=1 // pred_check
      _
    $region55: #{tpu_custom_call.1} parent=1 // pred_check_branch
      %191 = sbr.rel (0) target = $region57
    $region56: #{tpu_custom_call.1} parent=1 // pred_region
      %192 = dma.done [#allocation4], 512
    $region57: #{tpu_custom_call.1} parent=1 // pred_fallthru
      _
    %193 = vsyncpa [#allocation3], 1
    %194 = vsyncpa [#allocation6], 1
    %195 = vsyncpa [#allocation9], 1
    %196 = vsyncpa [#allocation12], 1
    %197 = vsyncpa [#allocation4], 1

</llo_original>
